<compile_context>
chip_gen: v5e
topology: v5e:2x2
jax: 0.10.0
libtpu: 0.0.40
codegen_flags: <defaults>
</compile_context>

<pallas_src>
import functools

import numpy as np
import jax
import jax.numpy as jnp
from jax.experimental import pallas as pl
from jax.experimental.pallas import tpu as pltpu


_COMPUTE_DTYPE = jnp.bfloat16   # MXU operand dtype (accumulation stays f32)
_BLOCK_BUDGET = 12 << 20        # single-buffered block budget (x2 fits v7x VMEM)
_VMEM_FLOOR = 32 << 20
_VMEM_CEIL = 64 << 20           # v7x physical VMEM; v5e/v6e have 128 MiB


# -----------------------------------------------------------------------------
# helpers
# -----------------------------------------------------------------------------
def _divisor_tile(extent, target, quantum, prefer_multi_step=False):
    """Largest divisor of `extent` that is a multiple of `quantum` and <= target.
    Falls back to the full extent (full-dim blocks are always legal)."""
    cap = min(int(target), extent)
    cands = [d for d in range(quantum, cap + 1, quantum) if extent % d == 0]
    if prefer_multi_step:
        multi = [d for d in cands if extent // d >= 2]
        if multi:
            return max(multi)
    return max(cands) if cands else extent


def _vmem_limit(block_bytes):
    """Explicit scoped-VMEM limit: double-buffered blocks + headroom."""
    return int(min(max(2 * block_bytes + (4 << 20), _VMEM_FLOOR), _VMEM_CEIL))


def _pick_pack(ho, wo, lane_target=128):
    """Smallest divisor g of ho with g*wo >= lane_target (lane-dense output)."""
    for g in range(1, ho + 1):
        if ho % g == 0 and g * wo >= lane_target:
            return g
    return ho


# -----------------------------------------------------------------------------
# use_conv=False branch:  F.pad(0,1,0,1) + AvgPool2d(stride, stride)
# -----------------------------------------------------------------------------
def _avgpool_kernel(x_ref, p_ref, o_ref):
    # x_ref: (RT, G*s*s*wo)  G packed output rows' worth of input per kernel row
    # p_ref: (G*s*s*wo, G*wo) block-diagonal pooling matrix (bf16, 1/s^2 taps)
    # o_ref: (RT, G*wo)      lane-dense output block
    o_ref[...] = jnp.dot(
        x_ref[...].astype(p_ref.dtype),
        p_ref[...],
        preferred_element_type=jnp.float32,
    ).astype(o_ref.dtype)


@functools.partial(jax.jit, static_argnames=("stride",))
def avgpool_downsample(x, stride=2):
    n, c, h, w = x.shape
    s = stride
    ho = (h + 1 - s) // s + 1
    wo = (w + 1 - s) // s + 1
    ht, wt = ho * s, wo * s

    # torch pads bottom/right by one zero; only materialize what is read.
    if ht > h or wt > w:
        x = jnp.pad(x, ((0, 0), (0, 0), (0, max(ht - h, 0)), (0, max(wt - w, 0))))
    if x.shape[2] != ht or x.shape[3] != wt:
        x = x[:, :, :ht, :wt]

    # Pack G output rows per kernel row so the output last dim is lane-dense.
    g_pack = _pick_pack(ho, wo)
    row_w = g_pack * s * wt            # input elements per kernel row
    gwo = g_pack * wo                  # output elements per kernel row
    r2 = (n * c * ho) // g_pack
    x2 = x.reshape(r2, row_w)          # free row-major reshape

    # Block-diagonal pooling matrix:
    #   P[(gr*s + d)*wt + m, gc*wo + j] = 1/s^2  iff gr == gc and m//s == j
    rows = np.arange(row_w)
    cols = np.arange(gwo)
    pool_np = ((rows[:, None] // (s * wt) == cols[None, :] // wo)
               & ((rows[:, None] % wt) // s == cols[None, :] % wo))
    pool = jnp.asarray(pool_np.astype(np.float32) / float(s * s),
                       dtype=_COMPUTE_DTYPE)

    in_b = x.dtype.itemsize
    rt_cap = max(_BLOCK_BUDGET // (row_w * in_b + gwo * in_b), 8)
    rt = _divisor_tile(r2, rt_cap, 8, prefer_multi_step=True)

    blk_bytes = (rt * row_w * in_b            # input block
                 + row_w * gwo * 2            # pool matrix (resident)
                 + rt * gwo * in_b)           # output block
    out = pl.pallas_call(
        _avgpool_kernel,
        out_shape=jax.ShapeDtypeStruct((r2, gwo), x.dtype),
        grid=(r2 // rt,),
        in_specs=[
            pl.BlockSpec((rt, row_w), lambda i: (i, 0)),
            pl.BlockSpec((row_w, gwo), lambda i: (0, 0)),
        ],
        out_specs=pl.BlockSpec((rt, gwo), lambda i: (i, 0)),
        compiler_params=pltpu.CompilerParams(
            dimension_semantics=("parallel",),
            vmem_limit_bytes=_vmem_limit(blk_bytes)),
        cost_estimate=pl.CostEstimate(
            flops=2 * r2 * row_w * gwo,
            transcendentals=0,
            bytes_accessed=r2 * row_w * in_b + row_w * gwo * 2 + r2 * gwo * in_b),
    )(x2, pool)
    return out.reshape(n, c, ho, wo)


# -----------------------------------------------------------------------------
# use_conv=True branch: Conv2d(in_c, out_c, kernel, stride, padding=kernel//2)
# -----------------------------------------------------------------------------
def _conv_matmul_kernel(w_ref, x_ref, b_ref, o_ref):
    # w_ref: (OC_t, C*k*k) bf16     x_ref: (C*k*k, SP_t) bf16
    # b_ref: (OC_t, 1) f32          o_ref: (OC_t, SP_t)  lane-dense
    acc = jnp.dot(w_ref[...], x_ref[...], preferred_element_type=jnp.float32)
    o_ref[...] = (acc + b_ref[...]).astype(o_ref.dtype)


@functools.partial(jax.jit, static_argnames=("kernel_size", "stride"))
def conv_downsample(x, weight, bias, kernel_size=3, stride=2):
    n, c, h, w = x.shape
    oc = weight.shape[0]
    k, s = kernel_size, stride
    p = k // 2
    hp, wp = h + 2 * p, w + 2 * p
    ho = (hp - k) // s + 1
    wo = (wp - k) // s + 1
    hw = ho * wo
    ckk = c * k * k

    # Wrapper-side pad + im2col (phase split): each tap becomes a contiguous
    # slice of `patches`, so the kernel only does plain loads + one matmul.
    xp = jnp.pad(x, ((0, 0), (0, 0), (p, p), (p, p)))
    taps = []
    for ki in range(k):
        for kj in range(k):
            taps.append(xp[:, :,
                           ki:ki + s * (ho - 1) + 1:s,
                           kj:kj + s * (wo - 1) + 1:s])        # (N, C, ho, wo)
    # (N, C, k*k, ho, wo) -> (N, C*k*k, ho*wo); matches weight.reshape(oc, C*k*k)
    patches = jnp.stack(taps, axis=2).reshape(n, ckk, hw).astype(_COMPUTE_DTYPE)

    w2 = weight.reshape(oc, ckk).astype(_COMPUTE_DTYPE)
    b2 = bias.reshape(oc, 1).astype(jnp.float32)

    oc_t = _divisor_tile(oc, 256, 8)                 # 256x256 MXU on v6e/v7x
    fixed = oc_t * ckk * 2 + oc_t * 4                # weights + bias block bytes
    sp_cap = max((_BLOCK_BUDGET - fixed) // (ckk * 2 + oc_t * x.dtype.itemsize), 128)
    sp_t = _divisor_tile(hw, sp_cap, 128, prefer_multi_step=True)

    blk_bytes = (oc_t * ckk * 2                      # weight block
                 + ckk * sp_t * 2                    # patch block
                 + oc_t * 4                          # bias block
                 + oc_t * sp_t * x.dtype.itemsize)   # output block
    grid = (n, hw // sp_t, oc // oc_t)

    out = pl.pallas_call(
        _conv_matmul_kernel,
        out_shape=jax.ShapeDtypeStruct((n, oc, hw), x.dtype),
        grid=grid,
        in_specs=[
            pl.BlockSpec((oc_t, ckk), lambda b, sp, j: (j, 0)),
            pl.BlockSpec((None, ckk, sp_t), lambda b, sp, j: (b, 0, sp)),
            pl.BlockSpec((oc_t, 1), lambda b, sp, j: (j, 0)),
        ],
        out_specs=pl.BlockSpec((None, oc_t, sp_t), lambda b, sp, j: (b, j, sp)),
        compiler_params=pltpu.CompilerParams(
            dimension_semantics=("parallel", "parallel", "parallel"),
            vmem_limit_bytes=_vmem_limit(blk_bytes)),
        cost_estimate=pl.CostEstimate(
            flops=2 * n * oc * ckk * hw,
            transcendentals=0,
            bytes_accessed=n * ckk * hw * 2
            + n * (hw // sp_t) * oc * ckk * 2
            + n * oc * hw * x.dtype.itemsize),
    )(w2, patches, b2)
    return out.reshape(n, oc, ho, wo)


# -----------------------------------------------------------------------------
# Module-equivalent wrapper
# -----------------------------------------------------------------------------
class Downsample:
    def __init__(self, in_channel, out_channel=None, use_conv=False,
                 kernel=3, stride=2, key=None):
        out_channel = in_channel if out_channel is None else out_channel
        self.out_channel = out_channel
        self.use_conv = use_conv
        self.kernel = kernel
        self.stride = stride
        self.padding = kernel // 2
        if use_conv:
            # deterministic init mimicking nn.Conv2d's uniform(-1/sqrt(fan_in), ...)
            key = jax.random.PRNGKey(42) if key is None else key
            kw, kb = jax.random.split(key)
            fan_in = in_channel * kernel * kernel
            bound = 1.0 / np.sqrt(fan_in)
            self.weight = jax.random.uniform(
                kw, (out_channel, in_channel, kernel, kernel), jnp.float32,
                -bound, bound)
            self.bias = jax.random.uniform(
                kb, (out_channel,), jnp.float32, -bound, bound)

    def __call__(self, x):
        if not self.use_conv:
            return avgpool_downsample(x, stride=self.stride)
        return conv_downsample(x, self.weight, self.bias,
                               kernel_size=self.kernel, stride=self.stride)


if __name__ == "__main__":
    key = jax.random.PRNGKey(0)
    k_x, k_p = jax.random.split(key)
    N, C, H, W = 2, 4, 16, 16
    OC, K, S = 8, 3, 2
    x = jax.random.normal(k_x, (N, C, H, W), jnp.float32)
    x_np = np.asarray(x)

    # ---- branch 1: use_conv=False (pad(0,1,0,1) + AvgPool2d(stride, stride)) ----
    m_pool = Downsample(C, use_conv=False, stride=S)
    y_pool = jax.block_until_ready(m_pool(x))

    ho = (H + 1 - S) // S + 1
    wo = (W + 1 - S) // S + 1
    ht, wt = ho * S, wo * S
    xp_np = np.pad(x_np, ((0, 0), (0, 0), (0, max(ht - H, 0)),
                          (0, max(wt - W, 0))))[:, :, :ht, :wt]
    ref_pool = xp_np.reshape(N, C, ho, S, wo, S).mean(axis=(3, 5))
    # tolerance accounts for bf16 MXU operands (f32 accumulation)
    np.testing.assert_allclose(np.asarray(y_pool), ref_pool, rtol=2e-2, atol=2e-2)

    # ---- branch 2: use_conv=True (strided Conv2d, padding=kernel//2) ----
    m_conv = Downsample(C, OC, use_conv=True, kernel=K, stride=S, key=k_p)
    y_conv = jax.block_until_ready(m_conv(x))

    w_np = np.asarray(m_conv.weight)
    b_np = np.asarray(m_conv.bias)
    P = K // 2
    hoc = (H + 2 * P - K) // S + 1
    woc = (W + 2 * P - K) // S + 1
    xpad = np.pad(x_np, ((0, 0), (0, 0), (P, P), (P, P)))
    ref_conv = np.zeros((N, OC, hoc, woc), np.float32)
    for i in range(hoc):
        for j in range(woc):
            patch = xpad[:, :, i * S:i * S + K, j * S:j * S + K]   # (N, C, K, K)
            ref_conv[:, :, i, j] = np.einsum('ncij,ocij->no', patch, w_np) + b_np[None, :]
    np.testing.assert_allclose(np.asarray(y_conv), ref_conv, rtol=2e-2, atol=2e-2)

    print("KERNEL_OK")
</pallas_src>

<mosaic_0001>
module attributes {stable_mosaic.version = 11 : i64} {
  func.func @_avgpool_kernel(%arg0: i32, %arg1: memref<8x256xf32, #tpu.memory_space<vmem>>, %arg2: memref<256x64xbf16, #tpu.memory_space<vmem>>, %arg3: memref<8x64xf32, #tpu.memory_space<vmem>>) attributes {dimension_semantics = [#tpu.dimension_semantics<parallel>], iteration_bounds = array<i64: 1>, scalar_prefetch = 0 : i64, scratch_operands = 0 : i64, tpu.core_type = #tpu.core_type<tc>, window_params = [{transform_indices = @transform_0, window_bounds = array<i64: 8, 256>}, {pipeline_mode = #tpu.pipeline_mode<synchronous>, transform_indices = @transform_1, window_bounds = array<i64: 256, 64>}, {transform_indices = @transform_2, window_bounds = array<i64: 8, 64>}]} {
    %c0 = arith.constant 0 : index
    %c0_0 = arith.constant 0 : index
    %0 = vector.load %arg1[%c0, %c0_0] : memref<8x256xf32, #tpu.memory_space<vmem>>, vector<8x256xf32>
    %1 = arith.truncf %0 : vector<8x256xf32> to vector<8x256xbf16>
    %c0_1 = arith.constant 0 : index
    %c0_2 = arith.constant 0 : index
    %2 = vector.load %arg2[%c0_1, %c0_2] : memref<256x64xbf16, #tpu.memory_space<vmem>>, vector<256x64xbf16>
    %cst = arith.constant dense<0.000000e+00> : vector<8x64xf32>
    %3 = tpu.matmul %1, %2, %cst {dimension_numbers = #tpu.dot_dimension_numbers<[1], [0], [0], [1], [0, 0, 1, 1], [], []>} : vector<8x256xbf16>, vector<256x64xbf16>, vector<8x64xf32> -> vector<8x64xf32>
    %c0_3 = arith.constant 0 : index
    %c0_4 = arith.constant 0 : index
    %4 = vector.load %arg3[%c0_3, %c0_4] : memref<8x64xf32, #tpu.memory_space<vmem>>, vector<8x64xf32>
    tpu.vector_store %arg3[%c0_3, %c0_4], %3 {strides = array<i32>} : memref<8x64xf32, #tpu.memory_space<vmem>>, vector<8x64xf32>,
    return
  }
  func.func @transform_0(%arg0: i32) -> (i32, i32) {
    %c0_i32 = arith.constant 0 : i32
    %c0_i32_0 = arith.constant 0 : i32
    return %arg0, %c0_i32 : i32, i32
  }
  func.func @transform_1(%arg0: i32) -> (i32, i32) {
    %c0_i32 = arith.constant 0 : i32
    %c0_i32_0 = arith.constant 0 : i32
    %c0_i32_1 = arith.constant 0 : i32
    return %c0_i32, %c0_i32_0 : i32, i32
  }
  func.func @transform_2(%arg0: i32) -> (i32, i32) {
    %c0_i32 = arith.constant 0 : i32
    %c0_i32_0 = arith.constant 0 : i32
    return %arg0, %c0_i32 : i32, i32
  }
}

</mosaic_0001>

<llo_original>
// kernel: avgpool_downsample.1
$region0: #{avgpool_downsample.1}
  #allocation0 [shape = 'u32[]', space=smem, size = 0x4, offset = 0x4, fixed_abs, tag = 'smem constant byte address 0x4 - core index']
  #allocation1 [shape = 'u32[72,128]{1,0:T(1,128)}', space=vmem, size = 0x9000, scoped, tag = 'internal scratch']
  %s0 = inlined_call_operand.vmem [shape: f32[8,256], index: 0, kind: input, shape index: {}]
  %s1 = inlined_call_operand.vmem [shape: bf16[256,64], index: 1, kind: input, shape index: {}]
  %s2 = inlined_call_operand.vmem [shape: f32[8,64], index: 2, kind: output, shape index: {}]
  %s3 = sld [smem:[#allocation0]]
  $region18: #{avgpool_downsample.1} parent=0
    _
  %s5 = ssub.s32 1, %s3
  %s6 = scalar_select 0, %s5, %s3
  // Predicated region
  $region2: #{avgpool_downsample.1} parent=0 // pred_check
    _
  $region3: #{avgpool_downsample.1} parent=0 // pred_check_branch
    %8 = sbr.rel (0) target = $region5
  $region4: #{avgpool_downsample.1} parent=0 // pred_region
    _
  $region5: #{avgpool_downsample.1} parent=0 // pred_fallthru
    _
  // Predicated region
  $region6: #{avgpool_downsample.1} parent=0 // pred_check
    _
  $region7: #{avgpool_downsample.1} parent=0 // pred_check_branch
    %10 = sbr.rel (0) target = $region9
  $region8: #{avgpool_downsample.1} parent=0 // pred_region
    _
  $region9: #{avgpool_downsample.1} parent=0 // pred_fallthru
    _
  %v11 = vld [vmem:[%s0] sm:$0xff]
  %v12 = vld [vmem:[%s0 + $0x8] sm:$0xff]
  %v13 = vpack.c.bf16 %v11, %v11
  %v14 = vpack.c.bf16 %v12, %v12
  %v15 = vld [vmem:[%s1] sm:$0xf]
  %v16 = vld [vmem:[%s1 + $0x4] sm:$0xf]
  %v17 = vld [vmem:[%s1 + $0x8] sm:$0xf]
  %v18 = vld [vmem:[%s1 + $0xc] sm:$0xf]
  %v19 = vld [vmem:[%s1 + $0x10] sm:$0xf]
  %v20 = vld [vmem:[%s1 + $0x14] sm:$0xf]
  %v21 = vld [vmem:[%s1 + $0x18] sm:$0xf]
  %v22 = vld [vmem:[%s1 + $0x1c] sm:$0xf]
  %v23 = vld [vmem:[%s1 + $0x20] sm:$0xf]
  %v24 = vld [vmem:[%s1 + $0x24] sm:$0xf]
  %v25 = vld [vmem:[%s1 + $0x28] sm:$0xf]
  %v26 = vld [vmem:[%s1 + $0x2c] sm:$0xf]
  %v27 = vld [vmem:[%s1 + $0x30] sm:$0xf]
  %v28 = vld [vmem:[%s1 + $0x34] sm:$0xf]
  %v29 = vld [vmem:[%s1 + $0x38] sm:$0xf]
  %v30 = vld [vmem:[%s1 + $0x3c] sm:$0xf]
  %v31 = vld [vmem:[%s1 + $0x40] sm:$0xf]
  %v32 = vld [vmem:[%s1 + $0x44] sm:$0xf]
  %v33 = vld [vmem:[%s1 + $0x48] sm:$0xf]
  %v34 = vld [vmem:[%s1 + $0x4c] sm:$0xf]
  %v35 = vld [vmem:[%s1 + $0x50] sm:$0xf]
  %v36 = vld [vmem:[%s1 + $0x54] sm:$0xf]
  %v37 = vld [vmem:[%s1 + $0x58] sm:$0xf]
  %v38 = vld [vmem:[%s1 + $0x5c] sm:$0xf]
  %v39 = vld [vmem:[%s1 + $0x60] sm:$0xf]
  %v40 = vld [vmem:[%s1 + $0x64] sm:$0xf]
  %v41 = vld [vmem:[%s1 + $0x68] sm:$0xf]
  %v42 = vld [vmem:[%s1 + $0x6c] sm:$0xf]
  %v43 = vld [vmem:[%s1 + $0x70] sm:$0xf]
  %v44 = vld [vmem:[%s1 + $0x74] sm:$0xf]
  %v45 = vld [vmem:[%s1 + $0x78] sm:$0xf]
  %v46 = vld [vmem:[%s1 + $0x7c] sm:$0xf]
  %v79 = vunpack.c.l.b16 %v15
  %v80 = vunpack.c.l.b16 %v16
  %v81 = vunpack.c.l.b16 %v17
  %v82 = vunpack.c.l.b16 %v18
  %v83 = vunpack.c.l.b16 %v19
  %v84 = vunpack.c.l.b16 %v20
  %v85 = vunpack.c.l.b16 %v21
  %v86 = vunpack.c.l.b16 %v22
  %v87 = vunpack.c.l.b16 %v23
  %v88 = vunpack.c.l.b16 %v24
  %v89 = vunpack.c.l.b16 %v25
  %v90 = vunpack.c.l.b16 %v26
  %v91 = vunpack.c.l.b16 %v27
  %v92 = vunpack.c.l.b16 %v28
  %v93 = vunpack.c.l.b16 %v29
  %v94 = vunpack.c.l.b16 %v30
  %v95 = vunpack.c.l.b16 %v31
  %v96 = vunpack.c.l.b16 %v32
  %v97 = vunpack.c.l.b16 %v33
  %v98 = vunpack.c.l.b16 %v34
  %v99 = vunpack.c.l.b16 %v35
  %v100 = vunpack.c.l.b16 %v36
  %v101 = vunpack.c.l.b16 %v37
  %v102 = vunpack.c.l.b16 %v38
  %v103 = vunpack.c.l.b16 %v39
  %v104 = vunpack.c.l.b16 %v40
  %v105 = vunpack.c.l.b16 %v41
  %v106 = vunpack.c.l.b16 %v42
  %v107 = vunpack.c.l.b16 %v43
  %v108 = vunpack.c.l.b16 %v44
  %v109 = vunpack.c.l.b16 %v45
  %v110 = vunpack.c.l.b16 %v46
  %v111 = vpack.c.b16 %v80, %v79
  %v112 = vpack.c.b16 %v82, %v81
  %v113 = vpack.c.b16 %v84, %v83
  %v114 = vpack.c.b16 %v86, %v85
  %v115 = vpack.c.b16 %v88, %v87
  %v116 = vpack.c.b16 %v90, %v89
  %v117 = vpack.c.b16 %v92, %v91
  %v118 = vpack.c.b16 %v94, %v93
  %v119 = vpack.c.b16 %v96, %v95
  %v120 = vpack.c.b16 %v98, %v97
  %v121 = vpack.c.b16 %v100, %v99
  %v122 = vpack.c.b16 %v102, %v101
  %v123 = vpack.c.b16 %v104, %v103
  %v124 = vpack.c.b16 %v106, %v105
  %v125 = vpack.c.b16 %v108, %v107
  %v126 = vpack.c.b16 %v110, %v109
  %143 = vmatpush.bf16.msra.mxu0 %v118
  %144 = vmatpush.bf16.msra.mxu0 %v117
  %145 = vmatpush.bf16.msra.mxu0 %v116
  %146 = vmatpush.bf16.msra.mxu0 %v115
  %147 = vmatpush.bf16.msra.mxu0 %v114
  %148 = vmatpush.bf16.msra.mxu0 %v113
  %149 = vmatpush.bf16.msra.mxu0 %v112
  %150 = vmatpush.bf16.msra.mxu0 %v111
  %151 = vmatmul.bf16.gmra.mxu0 %v13
  %v152 = vpop.f32.mrf.mxu0
  %v153 = vadd.f32 0.0, %v152
  %v154 = vpop.f32.mrf.mxu0
  %155 = vdwg.mxu0
  %156 = vmatpush.bf16.msra.mxu0 %v126
  %157 = vmatpush.bf16.msra.mxu0 %v125
  %158 = vmatpush.bf16.msra.mxu0 %v124
  %159 = vmatpush.bf16.msra.mxu0 %v123
  %160 = vmatpush.bf16.msra.mxu0 %v122
  %161 = vmatpush.bf16.msra.mxu0 %v121
  %162 = vmatpush.bf16.msra.mxu0 %v120
  %163 = vmatpush.bf16.msra.mxu0 %v119
  %164 = vmatmul.bf16.gmra.mxu0 %v14
  %v165 = vpop.f32.mrf.mxu0
  %v166 = vadd.f32 %v153, %v165
  %v167 = vpop.f32.mrf.mxu0
  %168 = vdwg.mxu0
  %vm169 = vcmask 523264
  %170 = vst.msk [vmem:[%s2] sm:$0xff] %vm169, %v166
  // Predicated region
  $region10: #{avgpool_downsample.1} parent=0 // pred_check
    _
  $region11: #{avgpool_downsample.1} parent=0 // pred_check_branch
    %172 = sbr.rel (0) target = $region13
  $region12: #{avgpool_downsample.1} parent=0 // pred_region
    _
  $region13: #{avgpool_downsample.1} parent=0 // pred_fallthru
    _
  // Predicated region
  $region14: #{avgpool_downsample.1} parent=0 // pred_check
    _
  $region15: #{avgpool_downsample.1} parent=0 // pred_check_branch
    %174 = sbr.rel (0) target = $region17
  $region16: #{avgpool_downsample.1} parent=0 // pred_region
    _
  $region17: #{avgpool_downsample.1} parent=0 // pred_fallthru
    _

</llo_original>
